<compile_context>
chip_gen: v5e
topology: v5e:2x2
jax: 0.10.0
libtpu: 0.0.40
codegen_flags: <defaults>
</compile_context>

<pallas_src>
import jax
import jax.numpy as jnp
from jax.experimental import pallas as pl
from jax.experimental.pallas import tpu as pltpu

_LANE = 128


def _round_up(x, m):
    return (x + m - 1) // m * m


def _gate_head_kernel(x_ref, w1_ref, b1_ref, w2_ref, b2_ref, o_ref):
    # x: [TB, H]  w1: [H, H]  b1: [1, H]  w2: [H, Lp]  b2: [1, Lp]  o: [TB, Lp]
    x = x_ref[...]

    # dense: x @ W1 + b1   (MXU in native dtype, f32 accumulation)
    h = jnp.dot(x, w1_ref[...], preferred_element_type=jnp.float32)
    h = h + b1_ref[...].astype(jnp.float32)

    # tanh in f32 (EUP/VPU; avoids bf16 vector path on v5e)
    h = jnp.tanh(h)

    # out_proj: h @ W2 + b2   (cast activations back to weight dtype for the MXU)
    h = h.astype(w2_ref.dtype)
    y = jnp.dot(h, w2_ref[...], preferred_element_type=jnp.float32)
    y = y + b2_ref[...].astype(jnp.float32)

    o_ref[...] = y.astype(o_ref.dtype)


def prepare_gate_head_params(w_dense, b_dense, w_out, b_out, param_dtype=None):
    """One-time parameter prep (call once, outside the hot path).

    w_dense: [H, H]  (PyTorch nn.Linear weight, [out, in])
    b_dense: [H]
    w_out  : [L, H]  (PyTorch nn.Linear weight, [out, in])
    b_out  : [L]

    Returns (w1 [H,H], b1 [1,H], w2 [H,L_pad], b2 [1,L_pad]) with weights
    pre-transposed to [in, out] and the output dim zero-padded to a multiple
    of 128 lanes. Biases are kept in f32.
    """
    H = w_dense.shape[0]
    L = w_out.shape[0]
    L_pad = _round_up(max(L, 1), _LANE)

    w1 = jnp.transpose(w_dense)                      # [H, H]
    b1 = b_dense.astype(jnp.float32).reshape(1, H)   # [1, H]

    w2 = jnp.zeros((H, L_pad), dtype=w_out.dtype)
    w2 = w2.at[:, :L].set(jnp.transpose(w_out))      # [H, L_pad]
    b2 = jnp.zeros((1, L_pad), dtype=jnp.float32)
    b2 = b2.at[:, :L].set(b_out.astype(jnp.float32).reshape(1, L))

    if param_dtype is not None:                      # e.g. jnp.bfloat16 for MXU path
        w1 = w1.astype(param_dtype)
        w2 = w2.astype(param_dtype)
    return w1, b1, w2, b2


def gate_classification_head(x, params, num_labels):
    """Pallas forward of GateClassificationHead.

    x      : [B, H]   (pooled features; any B, tiled over a grid)
    params : output of prepare_gate_head_params
    returns: [B, num_labels]
    """
    w1, b1, w2, b2 = params
    B, H = x.shape
    L_pad = w2.shape[1]

    # Batch tiling: big tiles amortize the ~0.35us/step overhead; small batches
    # get a single full-batch step (padded to a sublane multiple of 8).
    TB = 256 if B >= 256 else _round_up(B, 8)
    B_pad = _round_up(B, TB)
    if B_pad != B:
        x = jnp.pad(x, ((0, B_pad - B), (0, 0)))

    grid = (B_pad // TB,)

    itemsize = jnp.dtype(x.dtype).itemsize
    w_itemsize = jnp.dtype(w1.dtype).itemsize
    cost = pl.CostEstimate(
        flops=2 * B_pad * H * H + 2 * B_pad * H * L_pad,
        transcendentals=B_pad * H,  # tanh
        bytes_accessed=(B_pad * H + B_pad * L_pad) * itemsize
        + (H * H + H * L_pad) * w_itemsize
        + (H + L_pad) * 4,
    )

    out = pl.pallas_call(
        _gate_head_kernel,
        out_shape=jax.ShapeDtypeStruct((B_pad, L_pad), x.dtype),
        grid=grid,
        in_specs=[
            pl.BlockSpec((TB, H), lambda i: (i, 0)),      # x tile
            pl.BlockSpec((H, H), lambda i: (0, 0)),       # W1 resident
            pl.BlockSpec((1, H), lambda i: (0, 0)),       # b1 resident
            pl.BlockSpec((H, L_pad), lambda i: (0, 0)),   # W2 resident
            pl.BlockSpec((1, L_pad), lambda i: (0, 0)),   # b2 resident
        ],
        out_specs=pl.BlockSpec((TB, L_pad), lambda i: (i, 0)),  # lane-dense store
        compiler_params=pltpu.CompilerParams(
            dimension_semantics=("parallel",),
        ),
        cost_estimate=cost,
    )(x, w1, b1, w2, b2)

    return out[:B, :num_labels]


def _reference(x, w_dense, b_dense, w_out, b_out):
    h = jnp.tanh(x @ w_dense.T + b_dense)
    return h @ w_out.T + b_out


if __name__ == "__main__":
    # Module config: hidden_size=32, num_labels=4.
    hidden_size = 32
    num_labels = 4

    key = jax.random.PRNGKey(0)
    kx, kw1, kb1, kw2, kb2, kx2 = jax.random.split(key, 6)

    # nn.Linear-shaped params: weight [out, in], bias [out].
    w_dense = jax.random.normal(kw1, (hidden_size, hidden_size), dtype=jnp.float32) * 0.05
    b_dense = jax.random.normal(kb1, (hidden_size,), dtype=jnp.float32) * 0.05
    w_out = jax.random.normal(kw2, (num_labels, hidden_size), dtype=jnp.float32) * 0.05
    b_out = jax.random.normal(kb2, (num_labels,), dtype=jnp.float32) * 0.05

    # One-time parameter prep (transposes / padding hoisted out of the call path).
    params = prepare_gate_head_params(w_dense, b_dense, w_out, b_out)

    # Small batch (original shape): batch=8 pooled rows.
    x_small = jax.random.normal(kx, (8, hidden_size), dtype=jnp.float32)
    y_small = jax.block_until_ready(
        gate_classification_head(x_small, params, num_labels)
    )
    y_small_ref = _reference(x_small, w_dense, b_dense, w_out, b_out)
    assert y_small.shape == (8, num_labels)
    assert jnp.allclose(y_small, y_small_ref, atol=1e-5, rtol=1e-5), "small-batch mismatch"

    # Larger batch to exercise the B-grid + padding path (300 -> tile 256, 2 steps).
    x_big = jax.random.normal(kx2, (300, hidden_size), dtype=jnp.float32)
    y_big = jax.block_until_ready(
        gate_classification_head(x_big, params, num_labels)
    )
    y_big_ref = _reference(x_big, w_dense, b_dense, w_out, b_out)
    assert y_big.shape == (300, num_labels)
    assert jnp.allclose(y_big, y_big_ref, atol=1e-5, rtol=1e-5), "batched mismatch"

    print("KERNEL_OK")
</pallas_src>

<mosaic_0001>
module attributes {stable_mosaic.version = 11 : i64} {
  func.func @_gate_head_kernel(%arg0: i32, %arg1: memref<8x32xf32, #tpu.memory_space<vmem>>, %arg2: memref<32x32xf32, #tpu.memory_space<vmem>>, %arg3: memref<1x32xf32, #tpu.memory_space<vmem>>, %arg4: memref<32x128xf32, #tpu.memory_space<vmem>>, %arg5: memref<1x128xf32, #tpu.memory_space<vmem>>, %arg6: memref<8x128xf32, #tpu.memory_space<vmem>>) attributes {dimension_semantics = [#tpu.dimension_semantics<parallel>], iteration_bounds = array<i64: 1>, scalar_prefetch = 0 : i64, scratch_operands = 0 : i64, tpu.core_type = #tpu.core_type<tc>, window_params = [{transform_indices = @transform_0, window_bounds = array<i64: 8, 32>}, {pipeline_mode = #tpu.pipeline_mode<synchronous>, transform_indices = @transform_1, window_bounds = array<i64: 32, 32>}, {pipeline_mode = #tpu.pipeline_mode<synchronous>, transform_indices = @transform_2, window_bounds = array<i64: 1, 32>}, {pipeline_mode = #tpu.pipeline_mode<synchronous>, transform_indices = @transform_3, window_bounds = array<i64: 32, 128>}, {pipeline_mode = #tpu.pipeline_mode<synchronous>, transform_indices = @transform_4, window_bounds = array<i64: 1, 128>}, {transform_indices = @transform_5, window_bounds = array<i64: 8, 128>}]} {
    %c0 = arith.constant 0 : index
    %c0_0 = arith.constant 0 : index
    %0 = vector.load %arg1[%c0, %c0_0] : memref<8x32xf32, #tpu.memory_space<vmem>>, vector<8x32xf32>
    %c0_1 = arith.constant 0 : index
    %c0_2 = arith.constant 0 : index
    %1 = vector.load %arg2[%c0_1, %c0_2] : memref<32x32xf32, #tpu.memory_space<vmem>>, vector<32x32xf32>
    %cst = arith.constant dense<0.000000e+00> : vector<8x32xf32>
    %2 = tpu.matmul %0, %1, %cst {dimension_numbers = #tpu.dot_dimension_numbers<[1], [0], [0], [1], [0, 0, 1, 1], [], []>} : vector<8x32xf32>, vector<32x32xf32>, vector<8x32xf32> -> vector<8x32xf32>
    %c0_3 = arith.constant 0 : index
    %c0_4 = arith.constant 0 : index
    %3 = vector.load %arg3[%c0_3, %c0_4] : memref<1x32xf32, #tpu.memory_space<vmem>>, vector<1x32xf32>
    %4 = vector.broadcast %3 : vector<1x32xf32> to vector<8x32xf32>
    %5 = arith.addf %2, %4 : vector<8x32xf32>
    %6 = math.tanh %5 : vector<8x32xf32>
    %c0_5 = arith.constant 0 : index
    %c0_6 = arith.constant 0 : index
    %7 = vector.load %arg4[%c0_5, %c0_6] : memref<32x128xf32, #tpu.memory_space<vmem>>, vector<32x128xf32>
    %cst_7 = arith.constant dense<0.000000e+00> : vector<8x128xf32>
    %8 = tpu.matmul %6, %7, %cst_7 {dimension_numbers = #tpu.dot_dimension_numbers<[1], [0], [0], [1], [0, 0, 1, 1], [], []>} : vector<8x32xf32>, vector<32x128xf32>, vector<8x128xf32> -> vector<8x128xf32>
    %c0_8 = arith.constant 0 : index
    %c0_9 = arith.constant 0 : index
    %9 = vector.load %arg5[%c0_8, %c0_9] : memref<1x128xf32, #tpu.memory_space<vmem>>, vector<1x128xf32>
    %10 = vector.broadcast %9 : vector<1x128xf32> to vector<8x128xf32>
    %11 = arith.addf %8, %10 : vector<8x128xf32>
    %c0_10 = arith.constant 0 : index
    %c0_11 = arith.constant 0 : index
    %12 = vector.load %arg6[%c0_10, %c0_11] : memref<8x128xf32, #tpu.memory_space<vmem>>, vector<8x128xf32>
    tpu.vector_store %arg6[%c0_10, %c0_11], %11 {strides = array<i32>} : memref<8x128xf32, #tpu.memory_space<vmem>>, vector<8x128xf32>,
    return
  }
  func.func @transform_0(%arg0: i32) -> (i32, i32) {
    %c0_i32 = arith.constant 0 : i32
    %c0_i32_0 = arith.constant 0 : i32
    return %arg0, %c0_i32 : i32, i32
  }
  func.func @transform_1(%arg0: i32) -> (i32, i32) {
    %c0_i32 = arith.constant 0 : i32
    %c0_i32_0 = arith.constant 0 : i32
    %c0_i32_1 = arith.constant 0 : i32
    return %c0_i32, %c0_i32_0 : i32, i32
  }
  func.func @transform_2(%arg0: i32) -> (i32, i32) {
    %c0_i32 = arith.constant 0 : i32
    %c0_i32_0 = arith.constant 0 : i32
    %c0_i32_1 = arith.constant 0 : i32
    return %c0_i32, %c0_i32_0 : i32, i32
  }
  func.func @transform_3(%arg0: i32) -> (i32, i32) {
    %c0_i32 = arith.constant 0 : i32
    %c0_i32_0 = arith.constant 0 : i32
    %c0_i32_1 = arith.constant 0 : i32
    return %c0_i32, %c0_i32_0 : i32, i32
  }
  func.func @transform_4(%arg0: i32) -> (i32, i32) {
    %c0_i32 = arith.constant 0 : i32
    %c0_i32_0 = arith.constant 0 : i32
    %c0_i32_1 = arith.constant 0 : i32
    return %c0_i32, %c0_i32_0 : i32, i32
  }
  func.func @transform_5(%arg0: i32) -> (i32, i32) {
    %c0_i32 = arith.constant 0 : i32
    %c0_i32_0 = arith.constant 0 : i32
    return %arg0, %c0_i32 : i32, i32
  }
}

</mosaic_0001>

<llo_original>
// kernel: tpu_custom_call.1
$region0: #{tpu_custom_call.1}
  #allocation0 [shape = 'u32[]', space=smem, size = 0x4, offset = 0x4, fixed_abs, tag = 'smem constant byte address 0x4 - core index']
  #allocation1 [shape = 'u32[72,128]{1,0:T(1,128)}', space=vmem, size = 0x9000, scoped, tag = 'internal scratch']
  %s0 = inlined_call_operand.hbm [shape: f32[8,32], index: 0, kind: input, shape index: {}]
  %s1 = inlined_call_operand.hbm [shape: f32[32,32], index: 1, kind: input, shape index: {}]
  %s2 = inlined_call_operand.vmem [shape: f32[1,32], index: 2, kind: input, shape index: {}]
  %s3 = inlined_call_operand.hbm [shape: f32[32,128], index: 3, kind: input, shape index: {}]
  %s4 = inlined_call_operand.vmem [shape: f32[1,128], index: 4, kind: input, shape index: {}]
  %s5 = inlined_call_operand.hbm [shape: f32[8,128], index: 5, kind: output, shape index: {}]
  %s6 = sld [smem:[#allocation0]]
  $region42: #{tpu_custom_call.1} parent=0
    _
  %s8 = ssub.s32 1, %s6
  %s9 = scalar_select 0, %s8, %s6
  $region1: #{tpu_custom_call.1} parent=0
    #allocation2 [shape = 'u8[4096]{0}', space=vmem, size = 0x1000, scoped, tag = 'input window, operand 0, single buffered']
    #allocation3 [shape = 's32[1]{0}', space=sflag, size = 0x4, scoped, tag = 'scoped memory for tpu_custom_call.1']
    #allocation4 [shape = 's32[1]{0}', space=sflag, size = 0x4, scoped, tag = 'scoped memory for tpu_custom_call.1']
    #allocation5 [shape = 'u8[16384]{0}', space=vmem, size = 0x4000, scoped, tag = 'input window, operand 1, single buffered']
    #allocation6 [shape = 's32[1]{0}', space=sflag, size = 0x4, scoped, tag = 'scoped memory for tpu_custom_call.1']
    #allocation7 [shape = 'u8[16384]{0}', space=vmem, size = 0x4000, scoped, tag = 'input window, operand 3, single buffered']
    #allocation8 [shape = 'u8[4096]{0}', space=vmem, size = 0x1000, scoped, tag = 'output window, operand 0, single buffered']
    %10 = vsyncpa [#allocation3], 0
    %11 = vsyncpa [#allocation6], 0
    %12 = vsyncpa [#allocation4], 0
    // Predicated region
    $region2: #{tpu_custom_call.1} parent=1 // pred_check
      _
    $region3: #{tpu_custom_call.1} parent=1 // pred_check_branch
      %14 = sbr.rel (0) target = $region5
    $region4: #{tpu_custom_call.1} parent=1 // pred_region
      %16 = vsyncadd [#allocation3], 0
      %s18 = sshll.u32 %s0, 4
      %s19 = int_to_ptr.hbm [resolvable:$true] %s18
      %s20 = sshll.u32 [#allocation2], 4
      %s21 = int_to_ptr.vmem [resolvable:$true] %s20
      %23 = dma.hbm_to_vmem [thread:$0]  %s19, 128, %s21, [#allocation3]
    $region5: #{tpu_custom_call.1} parent=1 // pred_fallthru
      _
    // Predicated region
    $region6: #{tpu_custom_call.1} parent=1 // pred_check
      _
    $region7: #{tpu_custom_call.1} parent=1 // pred_check_branch
      %25 = sbr.rel (0) target = $region9
    $region8: #{tpu_custom_call.1} parent=1 // pred_region
      %27 = vsyncadd [#allocation6], 0
      %s28 = sshll.u32 %s1, 4
      %s29 = int_to_ptr.hbm [resolvable:$true] %s28
      %s30 = sshll.u32 [#allocation5], 4
      %s31 = int_to_ptr.vmem [resolvable:$true] %s30
      %36 = dma.hbm_to_vmem [thread:$0]  %s29, 512, %s31, [#allocation6], 128, 128, 8
    $region9: #{tpu_custom_call.1} parent=1 // pred_fallthru
      _
    // Predicated region
    $region10: #{tpu_custom_call.1} parent=1 // pred_check
      _
    $region11: #{tpu_custom_call.1} parent=1 // pred_check_branch
      %38 = sbr.rel (0) target = $region13
    $region12: #{tpu_custom_call.1} parent=1 // pred_region
      _
    $region13: #{tpu_custom_call.1} parent=1 // pred_fallthru
      _
    // Predicated region
    $region14: #{tpu_custom_call.1} parent=1 // pred_check
      _
    $region15: #{tpu_custom_call.1} parent=1 // pred_check_branch
      %40 = sbr.rel (0) target = $region17
    $region16: #{tpu_custom_call.1} parent=1 // pred_region
      %42 = vsyncadd [#allocation6], 0
      %s43 = sshll.u32 %s3, 4
      %s44 = int_to_ptr.hbm [resolvable:$true] %s43
      %s45 = sshll.u32 [#allocation7], 4
      %s46 = int_to_ptr.vmem [resolvable:$true] %s45
      %51 = dma.hbm_to_vmem [thread:$0]  %s44, 512, %s46, [#allocation6], 128, 128, 8
    $region17: #{tpu_custom_call.1} parent=1 // pred_fallthru
      _
    // Predicated region
    $region18: #{tpu_custom_call.1} parent=1 // pred_check
      _
    $region19: #{tpu_custom_call.1} parent=1 // pred_check_branch
      %53 = sbr.rel (0) target = $region21
    $region20: #{tpu_custom_call.1} parent=1 // pred_region
      _
    $region21: #{tpu_custom_call.1} parent=1 // pred_fallthru
      _
    // Predicated region
    $region22: #{tpu_custom_call.1} parent=1 // pred_check
      _
    $region23: #{tpu_custom_call.1} parent=1 // pred_check_branch
      %55 = sbr.rel (0) target = $region25
    $region24: #{tpu_custom_call.1} parent=1 // pred_region
      %57 = dma.done [#allocation3], 128
    $region25: #{tpu_custom_call.1} parent=1 // pred_fallthru
      _
    // Predicated region
    $region26: #{tpu_custom_call.1} parent=1 // pred_check
      _
    $region27: #{tpu_custom_call.1} parent=1 // pred_check_branch
      %59 = sbr.rel (0) target = $region29
    $region28: #{tpu_custom_call.1} parent=1 // pred_region
      %61 = dma.done [#allocation6], 512
    $region29: #{tpu_custom_call.1} parent=1 // pred_fallthru
      _
    // Predicated region
    $region30: #{tpu_custom_call.1} parent=1 // pred_check
      _
    $region31: #{tpu_custom_call.1} parent=1 // pred_check_branch
      %63 = sbr.rel (0) target = $region33
    $region32: #{tpu_custom_call.1} parent=1 // pred_region
      %65 = dma.done [#allocation6], 512
    $region33: #{tpu_custom_call.1} parent=1 // pred_fallthru
      _
    %v66 = vld [vmem:[#allocation2] sm:$0xff]
    %v67 = vld [vmem:[#allocation5] sm:$0xff]
    %v68 = vld [vmem:[#allocation5 + $0x8] sm:$0xff]
    %v69 = vld [vmem:[#allocation5 + $0x10] sm:$0xff]
    %v70 = vld [vmem:[#allocation5 + $0x18] sm:$0xff]
    %v71 = vld [vmem:[%s2] sm:$0x1]
    %v73 = vperm.slane %v71, 0
    %vm75 = vcmask 261120
    %v77 = vsel %vm75, %v66, 0
    %79 = vmatpush.msra.mxu0 0.0
    %80 = vmatpush.msra.mxu0 0.0
    %81 = vmatpush.msra.mxu0 0.0
    %82 = vmatpush.msra.mxu0 0.0
    %83 = vmatpush.msra.mxu0 0.0
    %84 = vmatpush.msra.mxu0 0.0
    %85 = vmatpush.msra.mxu0 0.0
    %86 = vmatpush.msra.mxu0 0.0
    %87 = vmatpush.msra.mxu0 0.0
    %88 = vmatpush.msra.mxu0 0.0
    %89 = vmatpush.msra.mxu0 0.0
    %90 = vmatpush.msra.mxu0 0.0
    %91 = vmatpush.msra.mxu0 %v70
    %92 = vmatpush.msra.mxu0 %v69
    %93 = vmatpush.msra.mxu0 %v68
    %94 = vmatpush.msra.mxu0 %v67
    %95 = vmatmul.f32.gmra.mxu0 %v77
    %v96 = vpop.f32.mrf.mxu0
    %v97 = vadd.f32 %v73, %v96
    %98 = vdwg.mxu0
    %v99 = vtanh.pop %v97
    %v100 = vld [vmem:[#allocation7] sm:$0xff]
    %v101 = vld [vmem:[#allocation7 + $0x8] sm:$0xff]
    %v102 = vld [vmem:[#allocation7 + $0x10] sm:$0xff]
    %v103 = vld [vmem:[#allocation7 + $0x18] sm:$0xff]
    %v104 = vld [vmem:[%s4] sm:$0x1]
    %v106 = vperm.slane %v104, 0
    %v109 = vsel %vm75, %v99, 0
    %111 = vmatpush.msra.mxu0 0.0
    %112 = vmatpush.msra.mxu0 0.0
    %113 = vmatpush.msra.mxu0 0.0
    %114 = vmatpush.msra.mxu0 0.0
    %115 = vmatpush.msra.mxu0 0.0
    %116 = vmatpush.msra.mxu0 0.0
    %117 = vmatpush.msra.mxu0 0.0
    %118 = vmatpush.msra.mxu0 0.0
    %119 = vmatpush.msra.mxu0 0.0
    %120 = vmatpush.msra.mxu0 0.0
    %121 = vmatpush.msra.mxu0 0.0
    %122 = vmatpush.msra.mxu0 0.0
    %123 = vmatpush.msra.mxu0 %v103
    %124 = vmatpush.msra.mxu0 %v102
    %125 = vmatpush.msra.mxu0 %v101
    %126 = vmatpush.msra.mxu0 %v100
    %127 = vmatmul.f32.gmra.mxu0 %v109
    %v128 = vpop.f32.mrf.mxu0
    %v129 = vadd.f32 %v106, %v128
    %130 = vdwg.mxu0
    %131 = vst [vmem:[#allocation8] sm:$0xff] %v129
    // Predicated region
    $region34: #{tpu_custom_call.1} parent=1 // pred_check
      _
    $region35: #{tpu_custom_call.1} parent=1 // pred_check_branch
      %133 = sbr.rel (0) target = $region37
    $region36: #{tpu_custom_call.1} parent=1 // pred_region
      %135 = vsyncadd [#allocation4], 0
      %s137 = sshll.u32 [#allocation8], 4
      %s138 = int_to_ptr.vmem [resolvable:$true] %s137
      %s139 = sshll.u32 %s5, 4
      %s140 = int_to_ptr.hbm [resolvable:$true] %s139
      %142 = dma.vmem_to_hbm [thread:$0]  %s138, 128, %s140, [#allocation4]
    $region37: #{tpu_custom_call.1} parent=1 // pred_fallthru
      _
    // Predicated region
    $region38: #{tpu_custom_call.1} parent=1 // pred_check
      _
    $region39: #{tpu_custom_call.1} parent=1 // pred_check_branch
      %144 = sbr.rel (0) target = $region41
    $region40: #{tpu_custom_call.1} parent=1 // pred_region
      %146 = dma.done [#allocation4], 128
    $region41: #{tpu_custom_call.1} parent=1 // pred_fallthru
      _
    %147 = vsyncpa [#allocation3], 1
    %148 = vsyncpa [#allocation6], 1
    %149 = vsyncpa [#allocation4], 1

</llo_original>
